<compile_context>
chip_gen: v5e
topology: v5e:2x2
jax: 0.10.0
libtpu: 0.0.40
codegen_flags: <defaults>
</compile_context>

<pallas_src>
import math

import jax
import jax.numpy as jnp
from jax.experimental import pallas as pl
from jax.experimental.pallas import tpu as pltpu

_HALF_LOG_2PI = 0.5 * math.log(2.0 * math.pi)


def _softplus(x):
    # Matches torch.nn.Softplus(beta=1, threshold=20).
    return jnp.where(x > 20.0, x, jnp.log1p(jnp.exp(jnp.minimum(x, 20.0))))


def _round_up(x, m):
    return ((x + m - 1) // m) * m


def _make_kernel(fast: bool):
    def kernel(latent_ref, obs_ref,
               w1_ref, b1_ref, w2_ref, b2_ref,
               w3m_ref, b3m_ref, w3s_ref, b3s_ref,
               out_ref):
        obs = obs_ref[...]                       # (TB, D), compute dtype (bf16 or f32)
        cdt = obs.dtype

        # Packed layer 1: both heads' first hidden layer in one dot, f32 accumulation.
        h = jnp.dot(obs, w1_ref[...], preferred_element_type=jnp.float32) + b1_ref[...]
        h = jnp.maximum(h, 0.0).astype(cdt)

        # Packed (block-diagonal) layer 2.
        h = jnp.dot(h, w2_ref[...], preferred_element_type=jnp.float32) + b2_ref[...]
        h = jnp.maximum(h, 0.0).astype(cdt)

        # Layer 3: one zero-padded matmul per head (avoids lane-slicing packed h).
        mean = jnp.dot(h, w3m_ref[...], preferred_element_type=jnp.float32) + b3m_ref[...]
        sd_pre = jnp.dot(h, w3s_ref[...], preferred_element_type=jnp.float32) + b3s_ref[...]
        sd = 1e-5 + _softplus(sd_pre)

        # Normal(mean, sd).log_prob(latent).sum(-1), all in f32.
        x = latent_ref[...]
        if fast:
            z = (x - mean) * pl.reciprocal(sd, approx=True)
        else:
            z = (x - mean) / sd
        logp = -0.5 * z * z - jnp.log(sd) - _HALF_LOG_2PI
        out_ref[...] = jnp.sum(logp, axis=-1, keepdims=True)

    return kernel


def init_params(key, input_dim, latent_dim_flat, dtype=jnp.float32):
    """PyTorch-Linear-style init: U(-1/sqrt(fan_in), 1/sqrt(fan_in)).
    Returns [wm1,bm1,wm2,bm2,wm3,bm3, ws1,bs1,ws2,bs2,ws3,bs3];
    weights are [in_features, out_features], biases [1, out_features]."""
    dims = [(input_dim, 16), (16, 8), (8, latent_dim_flat)] * 2
    params = []
    for fin, fout in dims:
        key, kw, kb = jax.random.split(key, 3)
        bound = 1.0 / math.sqrt(fin)
        params.append(jax.random.uniform(kw, (fin, fout), dtype, -bound, bound))
        params.append(jax.random.uniform(kb, (1, fout), dtype, -bound, bound))
    return params


def _pack_params(params, compute_dtype):
    """Fuse the two heads: concat layer-1, block-diag layer-2, zero-pad layer-3."""
    wm1, bm1, wm2, bm2, wm3, bm3, ws1, bs1, ws2, bs2, ws3, bs3 = params
    L = wm3.shape[1]
    h1m, h2m = wm2.shape
    h1s, h2s = ws2.shape

    w1 = jnp.concatenate([wm1, ws1], axis=1)                              # (D, 32)
    b1 = jnp.concatenate([bm1, bs1], axis=1)                              # (1, 32)

    w2 = jnp.zeros((h1m + h1s, h2m + h2s), wm2.dtype)                     # (32, 16) block-diag
    w2 = w2.at[:h1m, :h2m].set(wm2).at[h1m:, h2m:].set(ws2)
    b2 = jnp.concatenate([bm2, bs2], axis=1)                              # (1, 16)

    w3m = jnp.concatenate([wm3, jnp.zeros((h2s, L), wm3.dtype)], axis=0)  # (16, L)
    w3s = jnp.concatenate([jnp.zeros((h2m, L), ws3.dtype), ws3], axis=0)  # (16, L)

    w1, w2, w3m, w3s = (w.astype(compute_dtype) for w in (w1, w2, w3m, w3s))
    b1, b2, b3m, b3s = (b.astype(jnp.float32) for b in (b1, b2, bm3, bs3))
    return w1, b1, w2, b2, w3m, b3m, w3s, b3s


def critic_forward(latent, obs, params, *, block_b=512, use_bf16=True):
    """log_probs_q = Normal(mean(obs), sd(obs)).log_prob(latent_flat).sum(-1) -> shape (B,)."""
    # _prepare_input: flatten the last two dims if latent_dim was a (d1, d2) tuple.
    if latent.ndim == 3:
        latent = latent.reshape(latent.shape[0], -1)
    latent = latent.astype(jnp.float32)

    B, D = obs.shape
    L = latent.shape[-1]

    compute_dtype = jnp.bfloat16 if use_bf16 else jnp.float32
    obs_c = obs.astype(compute_dtype)
    packed = _pack_params(params, compute_dtype)

    # Batch tiling: TB is a multiple of 8, capped at block_b; pad the tail tile.
    tb = min(_round_up(block_b, 8), _round_up(B, 8))
    b_pad = _round_up(B, tb)
    if b_pad != B:
        obs_c = jnp.pad(obs_c, ((0, b_pad - B), (0, 0)))
        latent = jnp.pad(latent, ((0, b_pad - B), (0, 0)))

    grid = (b_pad // tb,)

    def tiled(shape):
        return pl.BlockSpec(shape, lambda i: (i, 0))

    def pinned(arr):
        # Constant block index -> stays VMEM-resident across grid steps (no re-DMA).
        return pl.BlockSpec(arr.shape, lambda i: (0, 0))

    in_specs = [tiled((tb, L)), tiled((tb, D))] + [pinned(p) for p in packed]
    out_spec = tiled((tb, 1))

    out = pl.pallas_call(
        _make_kernel(fast=use_bf16),
        out_shape=jax.ShapeDtypeStruct((b_pad, 1), jnp.float32),
        grid=grid,
        in_specs=in_specs,
        out_specs=out_spec,
        compiler_params=pltpu.CompilerParams(
            dimension_semantics=("parallel",)),
    )(latent, obs_c, *packed)
    return out[:B, 0]


def critic_forward_ref(latent, obs, params, *, use_bf16=False):
    """Pure-JAX reference; mirrors the kernel's matmul precision when use_bf16=True."""
    if latent.ndim == 3:
        latent = latent.reshape(latent.shape[0], -1)
    cdt = jnp.bfloat16 if use_bf16 else jnp.float32
    wm1, bm1, wm2, bm2, wm3, bm3, ws1, bs1, ws2, bs2, ws3, bs3 = params

    def head(w1, b1, w2, b2, w3, b3):
        h = jnp.maximum(jnp.dot(obs.astype(cdt), w1.astype(cdt),
                                preferred_element_type=jnp.float32) + b1, 0.0)
        h = jnp.maximum(jnp.dot(h.astype(cdt), w2.astype(cdt),
                                preferred_element_type=jnp.float32) + b2, 0.0)
        return jnp.dot(h.astype(cdt), w3.astype(cdt),
                       preferred_element_type=jnp.float32) + b3

    mean = head(wm1, bm1, wm2, bm2, wm3, bm3)
    sd = 1e-5 + _softplus(head(ws1, bs1, ws2, bs2, ws3, bs3))
    z = (latent.astype(jnp.float32) - mean) / sd
    logp = -0.5 * z * z - jnp.log(sd) - _HALF_LOG_2PI
    return jnp.sum(logp, axis=-1)


if __name__ == "__main__":
    key = jax.random.PRNGKey(0)
    input_dim = 32        # history_encoder_network.encoding_dim
    latent_dim = (2, 2)   # tuple case -> latent_dim_flat = 4

    k_lat, k_obs, k_lat2, k_obs2, k_par = jax.random.split(key, 5)
    params = init_params(k_par, input_dim, 4)

    # Case 1: tuple latent_dim (3-D latent), exact-f32 path, tail padding (B=12 -> TB=16).
    B1 = 12
    latent1 = jax.random.normal(k_lat, (B1,) + latent_dim, jnp.float32)
    obs1 = jax.random.normal(k_obs, (B1, input_dim), jnp.float32)
    out1 = critic_forward(latent1, obs1, params, use_bf16=False)
    jax.block_until_ready(out1)
    ref1 = critic_forward_ref(latent1, obs1, params, use_bf16=False)
    assert out1.shape == (B1,)
    assert jnp.allclose(out1, ref1, atol=2e-3, rtol=2e-3), (out1, ref1)

    # Case 2: int latent_dim, bf16 fast path, multi-tile pipelined grid
    # (B=1050 -> 3 tiles of 512 with a zero-padded tail).
    B2 = 1050
    latent2 = jax.random.normal(k_lat2, (B2, 4), jnp.float32)
    obs2 = jax.random.normal(k_obs2, (B2, input_dim), jnp.float32)
    out2 = critic_forward(latent2, obs2, params, block_b=512, use_bf16=True)
    jax.block_until_ready(out2)
    ref2 = critic_forward_ref(latent2, obs2, params, use_bf16=True)
    assert out2.shape == (B2,)
    assert jnp.allclose(out2, ref2, atol=1e-2, rtol=1e-2), (out2, ref2)

    print("KERNEL_OK")
</pallas_src>

<mosaic_0001>
module attributes {stable_mosaic.version = 11 : i64} {
  func.func @kernel(%arg0: i32, %arg1: memref<16x4xf32, #tpu.memory_space<vmem>>, %arg2: memref<16x32xf32, #tpu.memory_space<vmem>>, %arg3: memref<32x32xf32, #tpu.memory_space<vmem>>, %arg4: memref<1x32xf32, #tpu.memory_space<vmem>>, %arg5: memref<32x16xf32, #tpu.memory_space<vmem>>, %arg6: memref<1x16xf32, #tpu.memory_space<vmem>>, %arg7: memref<16x4xf32, #tpu.memory_space<vmem>>, %arg8: memref<1x4xf32, #tpu.memory_space<vmem>>, %arg9: memref<16x4xf32, #tpu.memory_space<vmem>>, %arg10: memref<1x4xf32, #tpu.memory_space<vmem>>, %arg11: memref<16x1xf32, #tpu.memory_space<vmem>>) attributes {dimension_semantics = [#tpu.dimension_semantics<parallel>], iteration_bounds = array<i64: 1>, scalar_prefetch = 0 : i64, scratch_operands = 0 : i64, tpu.core_type = #tpu.core_type<tc>, window_params = [{transform_indices = @transform_0, window_bounds = array<i64: 16, 4>}, {transform_indices = @transform_1, window_bounds = array<i64: 16, 32>}, {pipeline_mode = #tpu.pipeline_mode<synchronous>, transform_indices = @transform_2, window_bounds = array<i64: 32, 32>}, {pipeline_mode = #tpu.pipeline_mode<synchronous>, transform_indices = @transform_3, window_bounds = array<i64: 1, 32>}, {pipeline_mode = #tpu.pipeline_mode<synchronous>, transform_indices = @transform_4, window_bounds = array<i64: 32, 16>}, {pipeline_mode = #tpu.pipeline_mode<synchronous>, transform_indices = @transform_5, window_bounds = array<i64: 1, 16>}, {pipeline_mode = #tpu.pipeline_mode<synchronous>, transform_indices = @transform_6, window_bounds = array<i64: 16, 4>}, {pipeline_mode = #tpu.pipeline_mode<synchronous>, transform_indices = @transform_7, window_bounds = array<i64: 1, 4>}, {pipeline_mode = #tpu.pipeline_mode<synchronous>, transform_indices = @transform_8, window_bounds = array<i64: 16, 4>}, {pipeline_mode = #tpu.pipeline_mode<synchronous>, transform_indices = @transform_9, window_bounds = array<i64: 1, 4>}, {transform_indices = @transform_10, window_bounds = array<i64: 16, 1>}]} {
    %c0 = arith.constant 0 : index
    %c0_0 = arith.constant 0 : index
    %0 = vector.load %arg2[%c0, %c0_0] : memref<16x32xf32, #tpu.memory_space<vmem>>, vector<16x32xf32>
    %c0_1 = arith.constant 0 : index
    %c0_2 = arith.constant 0 : index
    %1 = vector.load %arg3[%c0_1, %c0_2] : memref<32x32xf32, #tpu.memory_space<vmem>>, vector<32x32xf32>
    %cst = arith.constant dense<0.000000e+00> : vector<16x32xf32>
    %2 = tpu.matmul %0, %1, %cst {dimension_numbers = #tpu.dot_dimension_numbers<[1], [0], [0], [1], [0, 0, 1, 1], [], []>} : vector<16x32xf32>, vector<32x32xf32>, vector<16x32xf32> -> vector<16x32xf32>
    %c0_3 = arith.constant 0 : index
    %c0_4 = arith.constant 0 : index
    %3 = vector.load %arg4[%c0_3, %c0_4] : memref<1x32xf32, #tpu.memory_space<vmem>>, vector<1x32xf32>
    %4 = vector.broadcast %3 : vector<1x32xf32> to vector<16x32xf32>
    %5 = arith.addf %2, %4 : vector<16x32xf32>
    %cst_5 = arith.constant 0.000000e+00 : f32
    %6 = vector.broadcast %cst_5 : f32 to vector<16x32xf32>
    %7 = arith.maximumf %5, %6 : vector<16x32xf32>
    %c0_6 = arith.constant 0 : index
    %c0_7 = arith.constant 0 : index
    %8 = vector.load %arg5[%c0_6, %c0_7] : memref<32x16xf32, #tpu.memory_space<vmem>>, vector<32x16xf32>
    %cst_8 = arith.constant dense<0.000000e+00> : vector<16x16xf32>
    %9 = tpu.matmul %7, %8, %cst_8 {dimension_numbers = #tpu.dot_dimension_numbers<[1], [0], [0], [1], [0, 0, 1, 1], [], []>} : vector<16x32xf32>, vector<32x16xf32>, vector<16x16xf32> -> vector<16x16xf32>
    %c0_9 = arith.constant 0 : index
    %c0_10 = arith.constant 0 : index
    %10 = vector.load %arg6[%c0_9, %c0_10] : memref<1x16xf32, #tpu.memory_space<vmem>>, vector<1x16xf32>
    %11 = vector.broadcast %10 : vector<1x16xf32> to vector<16x16xf32>
    %12 = arith.addf %9, %11 : vector<16x16xf32>
    %cst_11 = arith.constant 0.000000e+00 : f32
    %13 = vector.broadcast %cst_11 : f32 to vector<16x16xf32>
    %14 = arith.maximumf %12, %13 : vector<16x16xf32>
    %c0_12 = arith.constant 0 : index
    %c0_13 = arith.constant 0 : index
    %15 = vector.load %arg7[%c0_12, %c0_13] : memref<16x4xf32, #tpu.memory_space<vmem>>, vector<16x4xf32>
    %cst_14 = arith.constant dense<0.000000e+00> : vector<16x4xf32>
    %16 = tpu.matmul %14, %15, %cst_14 {dimension_numbers = #tpu.dot_dimension_numbers<[1], [0], [0], [1], [0, 0, 1, 1], [], []>} : vector<16x16xf32>, vector<16x4xf32>, vector<16x4xf32> -> vector<16x4xf32>
    %c0_15 = arith.constant 0 : index
    %c0_16 = arith.constant 0 : index
    %17 = vector.load %arg8[%c0_15, %c0_16] : memref<1x4xf32, #tpu.memory_space<vmem>>, vector<1x4xf32>
    %18 = vector.broadcast %17 : vector<1x4xf32> to vector<16x4xf32>
    %19 = arith.addf %16, %18 : vector<16x4xf32>
    %c0_17 = arith.constant 0 : index
    %c0_18 = arith.constant 0 : index
    %20 = vector.load %arg9[%c0_17, %c0_18] : memref<16x4xf32, #tpu.memory_space<vmem>>, vector<16x4xf32>
    %cst_19 = arith.constant dense<0.000000e+00> : vector<16x4xf32>
    %21 = tpu.matmul %14, %20, %cst_19 {dimension_numbers = #tpu.dot_dimension_numbers<[1], [0], [0], [1], [0, 0, 1, 1], [], []>} : vector<16x16xf32>, vector<16x4xf32>, vector<16x4xf32> -> vector<16x4xf32>
    %c0_20 = arith.constant 0 : index
    %c0_21 = arith.constant 0 : index
    %22 = vector.load %arg10[%c0_20, %c0_21] : memref<1x4xf32, #tpu.memory_space<vmem>>, vector<1x4xf32>
    %23 = vector.broadcast %22 : vector<1x4xf32> to vector<16x4xf32>
    %24 = arith.addf %21, %23 : vector<16x4xf32>
    %cst_22 = arith.constant 2.000000e+01 : f32
    %25 = vector.broadcast %cst_22 : f32 to vector<16x4xf32>
    %26 = arith.cmpf ogt, %24, %25 : vector<16x4xf32>
    %cst_23 = arith.constant 2.000000e+01 : f32
    %27 = vector.broadcast %cst_23 : f32 to vector<16x4xf32>
    %28 = arith.minimumf %24, %27 : vector<16x4xf32>
    %29 = math.exp %28 : vector<16x4xf32>
    %30 = math.log1p %29 : vector<16x4xf32>
    %31 = arith.select %26, %24, %30 : vector<16x4xi1>, vector<16x4xf32>
    %cst_24 = arith.constant 9.99999974E-6 : f32
    %32 = vector.broadcast %cst_24 : f32 to vector<16x4xf32>
    %33 = arith.addf %32, %31 : vector<16x4xf32>
    %c0_25 = arith.constant 0 : index
    %c0_26 = arith.constant 0 : index
    %34 = vector.load %arg1[%c0_25, %c0_26] : memref<16x4xf32, #tpu.memory_space<vmem>>, vector<16x4xf32>
    %35 = arith.subf %34, %19 : vector<16x4xf32>
    %36 = arith.divf %35, %33 : vector<16x4xf32>
    %cst_27 = arith.constant -5.000000e-01 : f32
    %37 = vector.broadcast %cst_27 : f32 to vector<16x4xf32>
    %38 = arith.mulf %37, %36 : vector<16x4xf32>
    %39 = arith.mulf %38, %36 : vector<16x4xf32>
    %40 = math.log %33 : vector<16x4xf32>
    %41 = arith.subf %39, %40 : vector<16x4xf32>
    %cst_28 = arith.constant 0.918938517 : f32
    %42 = vector.broadcast %cst_28 : f32 to vector<16x4xf32>
    %43 = arith.subf %41, %42 : vector<16x4xf32>
    %cst_29 = arith.constant dense<0.000000e+00> : vector<16xf32>
    %44 = vector.multi_reduction <add>, %43, %cst_29 [1] : vector<16x4xf32> to vector<16xf32>
    %45 = vector.shape_cast %44 : vector<16xf32> to vector<16x1xf32>
    %c0_30 = arith.constant 0 : index
    %c0_31 = arith.constant 0 : index
    %46 = vector.load %arg11[%c0_30, %c0_31] : memref<16x1xf32, #tpu.memory_space<vmem>>, vector<16x1xf32>
    tpu.vector_store %arg11[%c0_30, %c0_31], %45 {strides = array<i32>} : memref<16x1xf32, #tpu.memory_space<vmem>>, vector<16x1xf32>,
    return
  }
  func.func @transform_0(%arg0: i32) -> (i32, i32) {
    %c0_i32 = arith.constant 0 : i32
    %c0_i32_0 = arith.constant 0 : i32
    return %arg0, %c0_i32 : i32, i32
  }
  func.func @transform_1(%arg0: i32) -> (i32, i32) {
    %c0_i32 = arith.constant 0 : i32
    %c0_i32_0 = arith.constant 0 : i32
    return %arg0, %c0_i32 : i32, i32
  }
  func.func @transform_2(%arg0: i32) -> (i32, i32) {
    %c0_i32 = arith.constant 0 : i32
    %c0_i32_0 = arith.constant 0 : i32
    %c0_i32_1 = arith.constant 0 : i32
    return %c0_i32, %c0_i32_0 : i32, i32
  }
  func.func @transform_3(%arg0: i32) -> (i32, i32) {
    %c0_i32 = arith.constant 0 : i32
    %c0_i32_0 = arith.constant 0 : i32
    %c0_i32_1 = arith.constant 0 : i32
    return %c0_i32, %c0_i32_0 : i32, i32
  }
  func.func @transform_4(%arg0: i32) -> (i32, i32) {
    %c0_i32 = arith.constant 0 : i32
    %c0_i32_0 = arith.constant 0 : i32
    %c0_i32_1 = arith.constant 0 : i32
    return %c0_i32, %c0_i32_0 : i32, i32
  }
  func.func @transform_5(%arg0: i32) -> (i32, i32) {
    %c0_i32 = arith.constant 0 : i32
    %c0_i32_0 = arith.constant 0 : i32
    %c0_i32_1 = arith.constant 0 : i32
    return %c0_i32, %c0_i32_0 : i32, i32
  }
  func.func @transform_6(%arg0: i32) -> (i32, i32) {
    %c0_i32 = arith.constant 0 : i32
    %c0_i32_0 = arith.constant 0 : i32
    %c0_i32_1 = arith.constant 0 : i32
    return %c0_i32, %c0_i32_0 : i32, i32
  }
  func.func @transform_7(%arg0: i32) -> (i32, i32) {
    %c0_i32 = arith.constant 0 : i32
    %c0_i32_0 = arith.constant 0 : i32
    %c0_i32_1 = arith.constant 0 : i32
    return %c0_i32, %c0_i32_0 : i32, i32
  }
  func.func @transform_8(%arg0: i32) -> (i32, i32) {
    %c0_i32 = arith.constant 0 : i32
    %c0_i32_0 = arith.constant 0 : i32
    %c0_i32_1 = arith.constant 0 : i32
    return %c0_i32, %c0_i32_0 : i32, i32
  }
  func.func @transform_9(%arg0: i32) -> (i32, i32) {
    %c0_i32 = arith.constant 0 : i32
    %c0_i32_0 = arith.constant 0 : i32
    %c0_i32_1 = arith.constant 0 : i32
    return %c0_i32, %c0_i32_0 : i32, i32
  }
  func.func @transform_10(%arg0: i32) -> (i32, i32) {
    %c0_i32 = arith.constant 0 : i32
    %c0_i32_0 = arith.constant 0 : i32
    return %arg0, %c0_i32 : i32, i32
  }
}

</mosaic_0001>

<llo_original>
// kernel: tpu_custom_call.1
$region0: #{tpu_custom_call.1}
  #allocation0 [shape = 'u32[]', space=smem, size = 0x4, offset = 0x4, fixed_abs, tag = 'smem constant byte address 0x4 - core index']
  #allocation1 [shape = 'u32[72,128]{1,0:T(1,128)}', space=vmem, size = 0x9000, scoped, tag = 'internal scratch']
  %s0 = inlined_call_operand.vmem [shape: f32[16,4], index: 0, kind: input, shape index: {}]
  %s1 = inlined_call_operand.vmem [shape: f32[16,32], index: 1, kind: input, shape index: {}]
  %s2 = inlined_call_operand.vmem [shape: f32[32,32], index: 2, kind: input, shape index: {}]
  %s3 = inlined_call_operand.vmem [shape: f32[1,32], index: 3, kind: input, shape index: {}]
  %s4 = inlined_call_operand.vmem [shape: f32[32,16], index: 4, kind: input, shape index: {}]
  %s5 = inlined_call_operand.vmem [shape: f32[1,16], index: 5, kind: input, shape index: {}]
  %s6 = inlined_call_operand.vmem [shape: f32[16,4], index: 6, kind: input, shape index: {}]
  %s7 = inlined_call_operand.vmem [shape: f32[1,4], index: 7, kind: input, shape index: {}]
  %s8 = inlined_call_operand.vmem [shape: f32[16,4], index: 8, kind: input, shape index: {}]
  %s9 = inlined_call_operand.vmem [shape: f32[1,4], index: 9, kind: input, shape index: {}]
  %s10 = inlined_call_operand.vmem [shape: f32[16,1], index: 10, kind: output, shape index: {}]
  %s11 = sld [smem:[#allocation0]]
  $region50: #{tpu_custom_call.1} parent=0
    _
  %s13 = ssub.s32 1, %s11
  %s14 = scalar_select 0, %s13, %s11
  // Predicated region
  $region2: #{tpu_custom_call.1} parent=0 // pred_check
    _
  $region3: #{tpu_custom_call.1} parent=0 // pred_check_branch
    %16 = sbr.rel (0) target = $region5
  $region4: #{tpu_custom_call.1} parent=0 // pred_region
    _
  $region5: #{tpu_custom_call.1} parent=0 // pred_fallthru
    _
  // Predicated region
  $region6: #{tpu_custom_call.1} parent=0 // pred_check
    _
  $region7: #{tpu_custom_call.1} parent=0 // pred_check_branch
    %18 = sbr.rel (0) target = $region9
  $region8: #{tpu_custom_call.1} parent=0 // pred_region
    _
  $region9: #{tpu_custom_call.1} parent=0 // pred_fallthru
    _
  // Predicated region
  $region10: #{tpu_custom_call.1} parent=0 // pred_check
    _
  $region11: #{tpu_custom_call.1} parent=0 // pred_check_branch
    %20 = sbr.rel (0) target = $region13
  $region12: #{tpu_custom_call.1} parent=0 // pred_region
    _
  $region13: #{tpu_custom_call.1} parent=0 // pred_fallthru
    _
  // Predicated region
  $region14: #{tpu_custom_call.1} parent=0 // pred_check
    _
  $region15: #{tpu_custom_call.1} parent=0 // pred_check_branch
    %22 = sbr.rel (0) target = $region17
  $region16: #{tpu_custom_call.1} parent=0 // pred_region
    _
  $region17: #{tpu_custom_call.1} parent=0 // pred_fallthru
    _
  // Predicated region
  $region18: #{tpu_custom_call.1} parent=0 // pred_check
    _
  $region19: #{tpu_custom_call.1} parent=0 // pred_check_branch
    %24 = sbr.rel (0) target = $region21
  $region20: #{tpu_custom_call.1} parent=0 // pred_region
    _
  $region21: #{tpu_custom_call.1} parent=0 // pred_fallthru
    _
  // Predicated region
  $region22: #{tpu_custom_call.1} parent=0 // pred_check
    _
  $region23: #{tpu_custom_call.1} parent=0 // pred_check_branch
    %26 = sbr.rel (0) target = $region25
  $region24: #{tpu_custom_call.1} parent=0 // pred_region
    _
  $region25: #{tpu_custom_call.1} parent=0 // pred_fallthru
    _
  // Predicated region
  $region26: #{tpu_custom_call.1} parent=0 // pred_check
    _
  $region27: #{tpu_custom_call.1} parent=0 // pred_check_branch
    %28 = sbr.rel (0) target = $region29
  $region28: #{tpu_custom_call.1} parent=0 // pred_region
    _
  $region29: #{tpu_custom_call.1} parent=0 // pred_fallthru
    _
  // Predicated region
  $region30: #{tpu_custom_call.1} parent=0 // pred_check
    _
  $region31: #{tpu_custom_call.1} parent=0 // pred_check_branch
    %30 = sbr.rel (0) target = $region33
  $region32: #{tpu_custom_call.1} parent=0 // pred_region
    _
  $region33: #{tpu_custom_call.1} parent=0 // pred_fallthru
    _
  // Predicated region
  $region34: #{tpu_custom_call.1} parent=0 // pred_check
    _
  $region35: #{tpu_custom_call.1} parent=0 // pred_check_branch
    %32 = sbr.rel (0) target = $region37
  $region36: #{tpu_custom_call.1} parent=0 // pred_region
    _
  $region37: #{tpu_custom_call.1} parent=0 // pred_fallthru
    _
  // Predicated region
  $region38: #{tpu_custom_call.1} parent=0 // pred_check
    _
  $region39: #{tpu_custom_call.1} parent=0 // pred_check_branch
    %34 = sbr.rel (0) target = $region41
  $region40: #{tpu_custom_call.1} parent=0 // pred_region
    _
  $region41: #{tpu_custom_call.1} parent=0 // pred_fallthru
    _
  %v35 = vld [vmem:[%s1] sm:$0xff]
  %v36 = vld [vmem:[%s1 + $0x8] sm:$0xff]
  %v37 = vld [vmem:[%s2] sm:$0xff]
  %v38 = vld [vmem:[%s2 + $0x8] sm:$0xff]
  %v39 = vld [vmem:[%s2 + $0x10] sm:$0xff]
  %v40 = vld [vmem:[%s2 + $0x18] sm:$0xff]
  %v41 = vld [vmem:[%s3] sm:$0x1]
  %v43 = vperm.slane %v41, 0
  %vm45 = vcmask 261120
  %v47 = vsel %vm45, %v35, 0
  %v50 = vsel %vm45, %v36, 0
  %52 = vmatpush.msra.mxu0 0.0
  %53 = vmatpush.msra.mxu0 0.0
  %54 = vmatpush.msra.mxu0 0.0
  %55 = vmatpush.msra.mxu0 0.0
  %56 = vmatpush.msra.mxu0 0.0
  %57 = vmatpush.msra.mxu0 0.0
  %58 = vmatpush.msra.mxu0 0.0
  %59 = vmatpush.msra.mxu0 0.0
  %60 = vmatpush.msra.mxu0 0.0
  %61 = vmatpush.msra.mxu0 0.0
  %62 = vmatpush.msra.mxu0 0.0
  %63 = vmatpush.msra.mxu0 0.0
  %64 = vmatpush.msra.mxu0 %v40
  %65 = vmatpush.msra.mxu0 %v39
  %66 = vmatpush.msra.mxu0 %v38
  %67 = vmatpush.msra.mxu0 %v37
  %68 = vmatmul.f32.gmra.mxu0 %v47
  %v69 = vpop.f32.mrf.mxu0
  %v70 = vadd.f32 %v43, %v69
  %71 = vmatmul.f32.gmra.mxu0 %v50
  %v72 = vpop.f32.mrf.mxu0
  %v73 = vadd.f32 %v43, %v72
  %74 = vdwg.mxu0
  %v75 = vmax.f32 %v70, 0.0
  %v76 = vmax.f32 %v73, 0.0
  %v77 = vld [vmem:[%s4] sm:$0xff]
  %v78 = vld [vmem:[%s4 + $0x8] sm:$0xff]
  %v79 = vld [vmem:[%s4 + $0x10] sm:$0xff]
  %v80 = vld [vmem:[%s4 + $0x18] sm:$0xff]
  %v81 = vld [vmem:[%s5] sm:$0x1]
  %v83 = vperm.slane %v81, 0
  %v86 = vsel %vm45, %v75, 0
  %v89 = vsel %vm45, %v76, 0
  %91 = vmatpush.msra.mxu0 0.0
  %92 = vmatpush.msra.mxu0 0.0
  %93 = vmatpush.msra.mxu0 0.0
  %94 = vmatpush.msra.mxu0 0.0
  %95 = vmatpush.msra.mxu0 0.0
  %96 = vmatpush.msra.mxu0 0.0
  %97 = vmatpush.msra.mxu0 0.0
  %98 = vmatpush.msra.mxu0 0.0
  %99 = vmatpush.msra.mxu0 0.0
  %100 = vmatpush.msra.mxu0 0.0
  %101 = vmatpush.msra.mxu0 0.0
  %102 = vmatpush.msra.mxu0 0.0
  %103 = vmatpush.msra.mxu0 %v80
  %104 = vmatpush.msra.mxu0 %v79
  %105 = vmatpush.msra.mxu0 %v78
  %106 = vmatpush.msra.mxu0 %v77
  %107 = vmatmul.f32.gmra.mxu0 %v86
  %v108 = vpop.f32.mrf.mxu0
  %v109 = vadd.f32 %v83, %v108
  %110 = vmatmul.f32.gmra.mxu0 %v89
  %v111 = vpop.f32.mrf.mxu0
  %v112 = vadd.f32 %v83, %v111
  %113 = vdwg.mxu0
  %v114 = vmax.f32 %v109, 0.0
  %v115 = vmax.f32 %v112, 0.0
  %v116 = vld [vmem:[%s6] sm:$0xff]
  %v117 = vld [vmem:[%s6 + $0x8] sm:$0xff]
  %v118 = vld [vmem:[%s7] sm:$0x1]
  %v120 = vperm.slane %v118, 0
  %vm122 = vcmask 130048
  %v124 = vsel %vm122, %v114, 0
  %v127 = vsel %vm122, %v115, 0
  %129 = vmatpush.msra.mxu0 0.0
  %130 = vmatpush.msra.mxu0 0.0
  %131 = vmatpush.msra.mxu0 0.0
  %132 = vmatpush.msra.mxu0 0.0
  %133 = vmatpush.msra.mxu0 0.0
  %134 = vmatpush.msra.mxu0 0.0
  %135 = vmatpush.msra.mxu0 0.0
  %136 = vmatpush.msra.mxu0 0.0
  %137 = vmatpush.msra.mxu0 0.0
  %138 = vmatpush.msra.mxu0 0.0
  %139 = vmatpush.msra.mxu0 0.0
  %140 = vmatpush.msra.mxu0 0.0
  %141 = vmatpush.msra.mxu0 0.0
  %142 = vmatpush.msra.mxu0 0.0
  %143 = vmatpush.msra.mxu0 %v117
  %144 = vmatpush.msra.mxu0 %v116
  %145 = vmatmul.f32.gmra.mxu0 %v124
  %v146 = vpop.f32.mrf.mxu0
  %v147 = vadd.f32 %v120, %v146
  %148 = vmatmul.f32.gmra.mxu0 %v127
  %v149 = vpop.f32.mrf.mxu0
  %v150 = vadd.f32 %v120, %v149
  %151 = vdwg.mxu0
  %v152 = vld [vmem:[%s8] sm:$0xff]
  %v153 = vld [vmem:[%s8 + $0x8] sm:$0xff]
  %v154 = vld [vmem:[%s9] sm:$0x1]
  %v156 = vperm.slane %v154, 0
  %158 = vmatpush.msra.mxu0 0.0
  %159 = vmatpush.msra.mxu0 0.0
  %160 = vmatpush.msra.mxu0 0.0
  %161 = vmatpush.msra.mxu0 0.0
  %162 = vmatpush.msra.mxu0 0.0
  %163 = vmatpush.msra.mxu0 0.0
  %164 = vmatpush.msra.mxu0 0.0
  %165 = vmatpush.msra.mxu0 0.0
  %166 = vmatpush.msra.mxu0 0.0
  %167 = vmatpush.msra.mxu0 0.0
  %168 = vmatpush.msra.mxu0 0.0
  %169 = vmatpush.msra.mxu0 0.0
  %170 = vmatpush.msra.mxu0 0.0
  %171 = vmatpush.msra.mxu0 0.0
  %172 = vmatpush.msra.mxu0 %v153
  %173 = vmatpush.msra.mxu0 %v152
  %174 = vmatmul.f32.gmra.mxu0 %v124
  %v175 = vpop.f32.mrf.mxu0
  %v176 = vadd.f32 %v156, %v175
  %177 = vmatmul.f32.gmra.mxu0 %v127
  %v178 = vpop.f32.mrf.mxu0
  %v179 = vadd.f32 %v156, %v178
  %180 = vdwg.mxu0
  %vm181 = vcmp.gt.f32.partialorder %v176, 20.0
  %vm182 = vcmp.gt.f32.partialorder %v179, 20.0
  %v183 = vmin.f32 %v176, 20.0
  %v184 = vmin.f32 %v179, 20.0
  %v185 = vmul.f32 %v183, 1.442695
  %v186 = vpow.pop %v185
  %v187 = vmul.f32 %v184, 1.442695
  %v188 = vpow.pop %v187
  %v189 = vadd.f32 %v186, 1.0
  %v190 = vlog2.pop %v189
  %v191 = vmul.f32 %v190, 0.6931472
  %v192 = vmul.f32 -0.5, %v186
  %v193 = vadd.f32 %v192, 1.0
  %v194 = vmul.f32 %v193, %v186
  %v195 = vand.u32 2147483647, %v186
  %vm196 = vcmp.lt.f32.partialorder %v195, 0.0004427343
  %v197 = vsel %vm196, %v194, %v191
  %v198 = vadd.f32 %v188, 1.0
  %v199 = vlog2.pop %v198
  %v200 = vmul.f32 %v199, 0.6931472
  %v201 = vmul.f32 -0.5, %v188
  %v202 = vadd.f32 %v201, 1.0
  %v203 = vmul.f32 %v202, %v188
  %v204 = vand.u32 2147483647, %v188
  %vm205 = vcmp.lt.f32.partialorder %v204, 0.0004427343
  %v206 = vsel %vm205, %v203, %v200
  %v207 = vsel %vm181, %v176, %v197
  %v208 = vsel %vm182, %v179, %v206
  %v209 = vadd.f32 %v207, 1e-05
  %v210 = vadd.f32 %v208, 1e-05
  %v211 = vld [vmem:[%s0] sm:$0xff]
  %v212 = vld [vmem:[%s0 + $0x8] sm:$0xff]
  %v213 = vsub.f32 %v211, %v147
  %v214 = vsub.f32 %v212, %v150
  %v215 = vrcp.pop %v209
  %v216 = vmul.f32 %v209, %v215
  %v217 = vsub.f32 1.0, %v216
  %v218 = vmul.f32 %v215, %v217
  %v219 = vadd.f32 %v215, %v218
  %vm220 = vweird.f32 %v209
  %vm221 = vweird.f32 %v215
  %vm222 = vmor %vm220, %vm221
  %v223 = vsel %vm222, %v215, %v219
  %v224 = vand.u32 2147483647, %v209
  %vm225 = vcmp.eq.f32.partialorder %v224, 8.507059e+37
  %v226 = vand.u32 %v209, 2147483648
  %v227 = vor.u32 1.1754944e-38, %v226
  %v228 = vsel %vm225, %v227, %v223
  %v229 = vmul.f32 %v213, %v228
  %v230 = vrcp.pop %v210
  %v231 = vmul.f32 %v210, %v230
  %v232 = vsub.f32 1.0, %v231
  %v233 = vmul.f32 %v230, %v232
  %v234 = vadd.f32 %v230, %v233
  %vm235 = vweird.f32 %v210
  %vm236 = vweird.f32 %v230
  %vm237 = vmor %vm235, %vm236
  %v238 = vsel %vm237, %v230, %v234
  %v239 = vand.u32 2147483647, %v210
  %vm240 = vcmp.eq.f32.partialorder %v239, 8.507059e+37
  %v241 = vand.u32 %v210, 2147483648
  %v242 = vor.u32 1.1754944e-38, %v241
  %v243 = vsel %vm240, %v242, %v238
  %v244 = vmul.f32 %v214, %v243
  %v245 = vmul.f32 %v229, -0.5
  %v246 = vmul.f32 %v244, -0.5
  %v247 = vmul.f32 %v245, %v229
  %v248 = vmul.f32 %v246, %v244
  %v249 = vlog2.pop %v209
  %v250 = vmul.f32 %v249, 0.6931472
  %v251 = vlog2.pop %v210
  %v252 = vmul.f32 %v251, 0.6931472
  %v253 = vsub.f32 %v247, %v250
  %v254 = vsub.f32 %v248, %v252
  %v255 = vsub.f32 %v253, 0.9189385
  %v256 = vsub.f32 %v254, 0.9189385
  %vm257 = vcmask 31744
  %v258 = vsel %vm257, %v255, 0.0
  %259 = vadd.xlane.f32.xlu0 %v258
  %v260 = vpop.xlane.xlu0 %259
  %v261 = vsel %vm257, %v256, 0.0
  %262 = vadd.xlane.f32.xlu0 %v261
  %v263 = vpop.xlane.xlu0 %262
  %vm264 = vcmask 7168
  %265 = vst.msk [vmem:[%s10] sm:$0xff] %vm264, %v260
  %266 = vst.msk [vmem:[%s10 + $0x8] sm:$0xff] %vm264, %v263
  // Predicated region
  $region42: #{tpu_custom_call.1} parent=0 // pred_check
    _
  $region43: #{tpu_custom_call.1} parent=0 // pred_check_branch
    %268 = sbr.rel (0) target = $region45
  $region44: #{tpu_custom_call.1} parent=0 // pred_region
    _
  $region45: #{tpu_custom_call.1} parent=0 // pred_fallthru
    _
  // Predicated region
  $region46: #{tpu_custom_call.1} parent=0 // pred_check
    _
  $region47: #{tpu_custom_call.1} parent=0 // pred_check_branch
    %270 = sbr.rel (0) target = $region49
  $region48: #{tpu_custom_call.1} parent=0 // pred_region
    _
  $region49: #{tpu_custom_call.1} parent=0 // pred_fallthru
    _

</llo_original>
